<compile_context>
chip_gen: v6e
topology: v6e:2x2x1
jax: 0.10.0
libtpu: 0.0.40
codegen_flags: <defaults>
</compile_context>

<pallas_src>
import functools

import jax
import jax.numpy as jnp
from jax.experimental import pallas as pl
from jax.experimental.pallas import tpu as pltpu


def _merge_ln_linear_kernel(xe_ref, xo_ref, we_ref, wo_ref, b_ref, o_ref, *,
                            eps, inv_k):
    """Fused 2x2 patch-merge + LayerNorm(4C) + Linear for one row-stripe tile.

    xe_ref / xo_ref: (th, W2, 2C) even-/odd-row halves.  For output token t,
    the PyTorch-ordered 4C vector is
        [xe[t, 0:C], xo[t, 0:C], xe[t, C:2C], xo[t, C:2C]]
    gamma was folded into we/wo and beta into b_ref in prepare_params, so no
    channel concatenation or affine pass is needed inside the kernel.
    """
    th, w2, c2 = xe_ref.shape
    tm = th * w2

    # f32 for LN math.  The (th, W2, 2C) -> (th*W2, 2C) reshape is free when
    # th*W2 % 8 == 0 (the tile picker prefers that); otherwise it is a correct
    # in-VMEM relayout (only hit by tiny late-stage feature maps).
    xe = xe_ref[...].astype(jnp.float32).reshape(tm, c2)
    xo = xo_ref[...].astype(jnp.float32).reshape(tm, c2)

    # Single-pass LayerNorm statistics over the full 4C (both halves):
    # var = E[x^2] - mean^2.
    s = jnp.sum(xe, axis=-1, keepdims=True) + jnp.sum(xo, axis=-1, keepdims=True)
    ss = (jnp.sum(xe * xe, axis=-1, keepdims=True)
          + jnp.sum(xo * xo, axis=-1, keepdims=True))
    mean = s * inv_k
    var = jnp.maximum(ss * inv_k - mean * mean, 0.0)
    rstd = jax.lax.rsqrt(var + eps)
    shift = mean * rstd

    ne = xe * rstd - shift
    no = xo * rstd - shift

    # bf16 x bf16 matmuls on the MXU with f32 accumulation; gamma already
    # folded into the weights, beta already folded into the bias.
    acc = jnp.dot(ne.astype(we_ref.dtype), we_ref[...],
                  preferred_element_type=jnp.float32)
    acc = acc + jnp.dot(no.astype(wo_ref.dtype), wo_ref[...],
                        preferred_element_type=jnp.float32)
    acc = acc + b_ref[...]
    o_ref[...] = acc.reshape(th, w2, acc.shape[-1]).astype(o_ref.dtype)


def prepare_params(reduction_w, ln_gamma, ln_beta, *, weight_dtype=jnp.bfloat16):
    """One-time parameter prep (outside the hot path).

    reduction_w: (out_chans, 4C)  -- PyTorch nn.Linear weight layout
    ln_gamma, ln_beta: (4C,)
    Folds the LayerNorm affine into the linear layer:
        out = ((x-mean)*rstd) @ (gamma[:,None] * W^T) + beta @ W^T
    and splits the scaled weight into even-/odd-row-half channel blocks.
    """
    out_chans, dim = reduction_w.shape
    assert dim % 4 == 0, "LayerNorm dim must be 4 * in_chans"
    c = dim // 4

    wt = jnp.transpose(reduction_w, (1, 0)).astype(jnp.float32)        # (4C, out)
    w_scaled = ln_gamma.astype(jnp.float32)[:, None] * wt              # gamma fold (pre-cast)
    bias = ln_beta.astype(jnp.float32)[None, :] @ wt                   # (1, out)

    # Merged-channel order is [x0, x1, x2, x3] (chunks of C):
    #   even-row half carries [x0, x2]; odd-row half carries [x1, x3].
    we = jnp.concatenate([w_scaled[0 * c:1 * c], w_scaled[2 * c:3 * c]], axis=0)
    wo = jnp.concatenate([w_scaled[1 * c:2 * c], w_scaled[3 * c:4 * c]], axis=0)

    return {
        "we": we.astype(weight_dtype), "wo": wo.astype(weight_dtype),
        "bias": bias, "out_chans": out_chans, "in_chans": c,
    }


def _pick_row_tile(bh2, w2, c2, out_chans, in_bytes, out_bytes, *,
                   target_tokens=2048, vmem_budget_bytes=40 * 1024 * 1024,
                   min_grid_steps=2):
    """Pick th (rows of merged tokens per grid step).

    Targets ~2048 tokens/step (HBM-roofline plateau), capped by an explicit
    VMEM byte budget, preferring sublane-aligned token counts and at least
    `min_grid_steps` grid steps (so v7x's two TensorCores both get work).
    th always divides B*H/2 exactly, so there are no ragged tiles.
    """
    per_token = (2 * 2 * c2 * in_bytes            # xe/xo input, double-buffered
                 + 2 * out_chans * out_bytes      # output, double-buffered
                 + 2 * c2 * 4 + 2 * c2 * 2        # f32 + bf16 working copies
                 + out_chans * 4)                 # f32 accumulator
    fixed = 2 * c2 * out_chans * 2 + out_chans * 4  # bf16 weight halves + bias
    cap_tokens = max(w2, (vmem_budget_bytes - fixed) // max(per_token, 1))
    cap_tokens = min(cap_tokens, target_tokens)
    max_th = max(1, min(bh2, cap_tokens // max(w2, 1)))

    divisors = [th for th in range(max_th, 0, -1) if bh2 % th == 0]
    for th in divisors:                                   # 1st choice
        if (th * w2) % 8 == 0 and bh2 // th >= min_grid_steps:
            return th
    for th in divisors:                                   # 2nd: sublane-aligned
        if (th * w2) % 8 == 0:
            return th
    return divisors[0]                                    # largest that fits


def downsampling_block(x, H, W, prepared, *, eps=1e-5, out_dtype=None,
                       target_tokens=2048):
    """JAX/Pallas equivalent of Downsampling_block.forward(x, H, W).

    x: (B, L, C) with L == H * W.  `prepared` comes from prepare_params().
    Returns (B, ceil(H/2)*ceil(W/2), out_chans) in `out_dtype` (default: x.dtype).
    """
    B, L, C = x.shape
    assert L == H * W, "input feature has wrong size"
    assert C == prepared["in_chans"], "channel mismatch with prepared params"
    out_dtype = x.dtype if out_dtype is None else out_dtype

    # Pad H/W to even if needed (copy only happens in the odd case).
    if (H % 2 == 1) or (W % 2 == 1):
        xv = x.reshape(B, H, W, C)
        xv = jnp.pad(xv, ((0, 0), (0, H % 2), (0, W % 2), (0, 0)))
        Hp, Wp = xv.shape[1], xv.shape[2]
        x = xv.reshape(B, Hp * Wp, C)
    else:
        Hp, Wp = H, W

    H2, W2 = Hp // 2, Wp // 2
    C2 = 2 * C
    BH2 = B * H2
    out_chans = prepared["out_chans"]

    # Zero-copy view: (B*H2, row-parity, W2, 2C) of the row-major input.
    xview = x.reshape(BH2, 2, W2, C2)

    in_bytes = x.dtype.itemsize
    out_bytes = jnp.dtype(out_dtype).itemsize
    th = _pick_row_tile(BH2, W2, C2, out_chans, in_bytes, out_bytes,
                        target_tokens=target_tokens)
    tm = th * W2
    grid = (BH2 // th,)

    # Right-size scoped VMEM from the actual tile working set (v7x has only
    # 64 MiB physical VMEM); clamp to [32, 48] MiB.
    tile_bytes = (2 * 2 * tm * C2 * in_bytes           # inputs, double-buffered
                  + 2 * tm * out_chans * out_bytes     # output, double-buffered
                  + 2 * tm * C2 * 4 + 2 * tm * C2 * 2  # f32/bf16 working copies
                  + tm * out_chans * 4                 # f32 accumulator
                  + 2 * C2 * out_chans * 2             # bf16 weight halves
                  + out_chans * 4)                     # folded bias
    vmem_limit = int(1.5 * tile_bytes) + (8 << 20)
    vmem_limit = max(32 << 20, min(vmem_limit, 48 << 20))

    x_block = (th, None, W2, C2)      # row-parity dim squeezed out
    kernel = functools.partial(_merge_ln_linear_kernel, eps=eps,
                               inv_k=1.0 / (4.0 * C))

    out3d = pl.pallas_call(
        kernel,
        out_shape=jax.ShapeDtypeStruct((BH2, W2, out_chans), out_dtype),
        grid_spec=pltpu.PrefetchScalarGridSpec(
            num_scalar_prefetch=0,
            grid=grid,
            in_specs=[
                pl.BlockSpec(x_block, lambda i: (i, 0, 0, 0)),       # even rows
                pl.BlockSpec(x_block, lambda i: (i, 1, 0, 0)),       # odd rows
                pl.BlockSpec((C2, out_chans), lambda i: (0, 0)),     # gamma-folded W (even half)
                pl.BlockSpec((C2, out_chans), lambda i: (0, 0)),     # gamma-folded W (odd half)
                pl.BlockSpec((1, out_chans), lambda i: (0, 0)),      # beta-folded bias
            ],
            # Unpadded, full-extent last two dims -> always legal, no wrapper
            # slice / extra output pass; reshape to (B, L/4, out) is zero-copy.
            out_specs=pl.BlockSpec((th, W2, out_chans), lambda i: (i, 0, 0)),
        ),
        compiler_params=pltpu.CompilerParams(
            dimension_semantics=("parallel",),      # shards rows over 2 TCs (v7x)
            vmem_limit_bytes=vmem_limit,
        ),
    )(xview, xview, prepared["we"], prepared["wo"], prepared["bias"])

    return out3d.reshape(B, H2 * W2, out_chans)


def _reference(x, H, W, reduction_w, ln_gamma, ln_beta, eps=1e-5):
    """Pure-JAX f32 reference mirroring the PyTorch forward."""
    B, L, C = x.shape
    xv = x.reshape(B, H, W, C)
    if (H % 2 == 1) or (W % 2 == 1):
        xv = jnp.pad(xv, ((0, 0), (0, H % 2), (0, W % 2), (0, 0)))
    x0 = xv[:, 0::2, 0::2, :]
    x1 = xv[:, 1::2, 0::2, :]
    x2 = xv[:, 0::2, 1::2, :]
    x3 = xv[:, 1::2, 1::2, :]
    xm = jnp.concatenate([x0, x1, x2, x3], axis=-1).reshape(B, -1, 4 * C)
    xm = xm.astype(jnp.float32)
    mean = jnp.mean(xm, axis=-1, keepdims=True)
    var = jnp.mean((xm - mean) ** 2, axis=-1, keepdims=True)
    xn = (xm - mean) * jax.lax.rsqrt(var + eps)
    y = xn * ln_gamma + ln_beta
    return jnp.einsum("blk,ok->blo", y, reduction_w)


if __name__ == "__main__":
    # Small shapes consistent with the module: in_chans=4, 16x16 feature map.
    B, C, H, W = 2, 4, 16, 16
    out_chans = 8
    dim = 4 * C

    key = jax.random.PRNGKey(0)
    kx, kw, kg, kb = jax.random.split(key, 4)

    x = jax.random.normal(kx, (B, H * W, C), dtype=jnp.float32)
    reduction_w = 0.05 * jax.random.normal(kw, (out_chans, dim), jnp.float32)
    ln_gamma = 1.0 + 0.1 * jax.random.normal(kg, (dim,), jnp.float32)
    ln_beta = 0.1 * jax.random.normal(kb, (dim,), jnp.float32)

    prepared = prepare_params(reduction_w, ln_gamma, ln_beta)

    out = downsampling_block(x, H, W, prepared)
    out = jax.block_until_ready(out)

    ref = _reference(x, H, W, reduction_w, ln_gamma, ln_beta)
    assert out.shape == (B, (H // 2) * (W // 2), out_chans), out.shape
    max_err = float(jnp.max(jnp.abs(out - ref)))
    # bf16 MXU matmul (gamma folded into weights before bf16 cast) vs f32 ref.
    assert jnp.allclose(out, ref, atol=2e-2, rtol=2e-2), max_err

    print("KERNEL_OK")
</pallas_src>

<mosaic_0001>
module attributes {stable_mosaic.version = 11 : i64} {
  func.func @_merge_ln_linear_kernel(%arg0: i32, %arg1: memref<8x1x8x8xf32, #tpu.memory_space<vmem>>, %arg2: memref<8x1x8x8xf32, #tpu.memory_space<vmem>>, %arg3: memref<8x8xbf16, #tpu.memory_space<vmem>>, %arg4: memref<8x8xbf16, #tpu.memory_space<vmem>>, %arg5: memref<1x8xf32, #tpu.memory_space<vmem>>, %arg6: memref<8x8x8xf32, #tpu.memory_space<vmem>>) attributes {dimension_semantics = [#tpu.dimension_semantics<parallel>], iteration_bounds = array<i64: 2>, scalar_prefetch = 0 : i64, scratch_operands = 0 : i64, tpu.core_type = #tpu.core_type<tc>, window_params = [{transform_indices = @transform_0, window_bounds = array<i64: 8, 1, 8, 8>}, {transform_indices = @transform_1, window_bounds = array<i64: 8, 1, 8, 8>}, {pipeline_mode = #tpu.pipeline_mode<synchronous>, transform_indices = @transform_2, window_bounds = array<i64: 8, 8>}, {pipeline_mode = #tpu.pipeline_mode<synchronous>, transform_indices = @transform_3, window_bounds = array<i64: 8, 8>}, {pipeline_mode = #tpu.pipeline_mode<synchronous>, transform_indices = @transform_4, window_bounds = array<i64: 1, 8>}, {transform_indices = @transform_5, window_bounds = array<i64: 8, 8, 8>}]} {
    %c0 = arith.constant 0 : index
    %c0_0 = arith.constant 0 : index
    %c0_1 = arith.constant 0 : index
    %c0_2 = arith.constant 0 : index
    %0 = vector.load %arg1[%c0, %c0_0, %c0_1, %c0_2] : memref<8x1x8x8xf32, #tpu.memory_space<vmem>>, vector<8x1x8x8xf32>
    %1 = vector.shape_cast %0 : vector<8x1x8x8xf32> to vector<8x8x8xf32>
    %2 = vector.shape_cast %1 : vector<8x8x8xf32> to vector<64x8xf32>
    %c0_3 = arith.constant 0 : index
    %c0_4 = arith.constant 0 : index
    %c0_5 = arith.constant 0 : index
    %c0_6 = arith.constant 0 : index
    %3 = vector.load %arg2[%c0_3, %c0_4, %c0_5, %c0_6] : memref<8x1x8x8xf32, #tpu.memory_space<vmem>>, vector<8x1x8x8xf32>
    %4 = vector.shape_cast %3 : vector<8x1x8x8xf32> to vector<8x8x8xf32>
    %5 = vector.shape_cast %4 : vector<8x8x8xf32> to vector<64x8xf32>
    %cst = arith.constant dense<0.000000e+00> : vector<64xf32>
    %6 = vector.multi_reduction <add>, %2, %cst [1] : vector<64x8xf32> to vector<64xf32>
    %7 = vector.shape_cast %6 : vector<64xf32> to vector<64x1xf32>
    %cst_7 = arith.constant dense<0.000000e+00> : vector<64xf32>
    %8 = vector.multi_reduction <add>, %5, %cst_7 [1] : vector<64x8xf32> to vector<64xf32>
    %9 = vector.shape_cast %8 : vector<64xf32> to vector<64x1xf32>
    %10 = arith.addf %7, %9 : vector<64x1xf32>
    %11 = arith.mulf %2, %2 : vector<64x8xf32>
    %cst_8 = arith.constant dense<0.000000e+00> : vector<64xf32>
    %12 = vector.multi_reduction <add>, %11, %cst_8 [1] : vector<64x8xf32> to vector<64xf32>
    %13 = vector.shape_cast %12 : vector<64xf32> to vector<64x1xf32>
    %14 = arith.mulf %5, %5 : vector<64x8xf32>
    %cst_9 = arith.constant dense<0.000000e+00> : vector<64xf32>
    %15 = vector.multi_reduction <add>, %14, %cst_9 [1] : vector<64x8xf32> to vector<64xf32>
    %16 = vector.shape_cast %15 : vector<64xf32> to vector<64x1xf32>
    %17 = arith.addf %13, %16 : vector<64x1xf32>
    %cst_10 = arith.constant 6.250000e-02 : f32
    %18 = vector.broadcast %cst_10 : f32 to vector<64x1xf32>
    %19 = arith.mulf %10, %18 : vector<64x1xf32>
    %cst_11 = arith.constant 6.250000e-02 : f32
    %20 = vector.broadcast %cst_11 : f32 to vector<64x1xf32>
    %21 = arith.mulf %17, %20 : vector<64x1xf32>
    %22 = arith.mulf %19, %19 : vector<64x1xf32>
    %23 = arith.subf %21, %22 : vector<64x1xf32>
    %cst_12 = arith.constant 0.000000e+00 : f32
    %24 = vector.broadcast %cst_12 : f32 to vector<64x1xf32>
    %25 = arith.maximumf %23, %24 : vector<64x1xf32>
    %cst_13 = arith.constant 9.99999974E-6 : f32
    %26 = vector.broadcast %cst_13 : f32 to vector<64x1xf32>
    %27 = arith.addf %25, %26 : vector<64x1xf32>
    %28 = math.rsqrt %27 : vector<64x1xf32>
    %29 = arith.mulf %19, %28 : vector<64x1xf32>
    %30 = vector.broadcast %28 : vector<64x1xf32> to vector<64x8xf32>
    %31 = arith.mulf %2, %30 : vector<64x8xf32>
    %32 = vector.broadcast %29 : vector<64x1xf32> to vector<64x8xf32>
    %33 = arith.subf %31, %32 : vector<64x8xf32>
    %34 = vector.broadcast %28 : vector<64x1xf32> to vector<64x8xf32>
    %35 = arith.mulf %5, %34 : vector<64x8xf32>
    %36 = vector.broadcast %29 : vector<64x1xf32> to vector<64x8xf32>
    %37 = arith.subf %35, %36 : vector<64x8xf32>
    %38 = arith.truncf %33 : vector<64x8xf32> to vector<64x8xbf16>
    %c0_14 = arith.constant 0 : index
    %c0_15 = arith.constant 0 : index
    %39 = vector.load %arg3[%c0_14, %c0_15] : memref<8x8xbf16, #tpu.memory_space<vmem>>, vector<8x8xbf16>
    %cst_16 = arith.constant dense<0.000000e+00> : vector<64x8xf32>
    %40 = tpu.matmul %38, %39, %cst_16 {dimension_numbers = #tpu.dot_dimension_numbers<[1], [0], [0], [1], [0, 0, 1, 1], [], []>} : vector<64x8xbf16>, vector<8x8xbf16>, vector<64x8xf32> -> vector<64x8xf32>
    %41 = arith.truncf %37 : vector<64x8xf32> to vector<64x8xbf16>
    %c0_17 = arith.constant 0 : index
    %c0_18 = arith.constant 0 : index
    %42 = vector.load %arg4[%c0_17, %c0_18] : memref<8x8xbf16, #tpu.memory_space<vmem>>, vector<8x8xbf16>
    %cst_19 = arith.constant dense<0.000000e+00> : vector<64x8xf32>
    %43 = tpu.matmul %41, %42, %cst_19 {dimension_numbers = #tpu.dot_dimension_numbers<[1], [0], [0], [1], [0, 0, 1, 1], [], []>} : vector<64x8xbf16>, vector<8x8xbf16>, vector<64x8xf32> -> vector<64x8xf32>
    %44 = arith.addf %40, %43 : vector<64x8xf32>
    %c0_20 = arith.constant 0 : index
    %c0_21 = arith.constant 0 : index
    %45 = vector.load %arg5[%c0_20, %c0_21] : memref<1x8xf32, #tpu.memory_space<vmem>>, vector<1x8xf32>
    %46 = vector.broadcast %45 : vector<1x8xf32> to vector<64x8xf32>
    %47 = arith.addf %44, %46 : vector<64x8xf32>
    %48 = vector.shape_cast %47 : vector<64x8xf32> to vector<8x8x8xf32>
    %c0_22 = arith.constant 0 : index
    %c0_23 = arith.constant 0 : index
    %c0_24 = arith.constant 0 : index
    %49 = vector.load %arg6[%c0_22, %c0_23, %c0_24] : memref<8x8x8xf32, #tpu.memory_space<vmem>>, vector<8x8x8xf32>
    tpu.vector_store %arg6[%c0_22, %c0_23, %c0_24], %48 {strides = array<i32>} : memref<8x8x8xf32, #tpu.memory_space<vmem>>, vector<8x8x8xf32>,
    return
  }
  func.func @transform_0(%arg0: i32) -> (i32, i32, i32, i32) {
    %c0_i32 = arith.constant 0 : i32
    %c0_i32_0 = arith.constant 0 : i32
    %c0_i32_1 = arith.constant 0 : i32
    %c0_i32_2 = arith.constant 0 : i32
    return %arg0, %c0_i32, %c0_i32_0, %c0_i32_1 : i32, i32, i32, i32
  }
  func.func @transform_1(%arg0: i32) -> (i32, i32, i32, i32) {
    %c1_i32 = arith.constant 1 : i32
    %c0_i32 = arith.constant 0 : i32
    %c0_i32_0 = arith.constant 0 : i32
    %c0_i32_1 = arith.constant 0 : i32
    return %arg0, %c1_i32, %c0_i32, %c0_i32_0 : i32, i32, i32, i32
  }
  func.func @transform_2(%arg0: i32) -> (i32, i32) {
    %c0_i32 = arith.constant 0 : i32
    %c0_i32_0 = arith.constant 0 : i32
    %c0_i32_1 = arith.constant 0 : i32
    return %c0_i32, %c0_i32_0 : i32, i32
  }
  func.func @transform_3(%arg0: i32) -> (i32, i32) {
    %c0_i32 = arith.constant 0 : i32
    %c0_i32_0 = arith.constant 0 : i32
    %c0_i32_1 = arith.constant 0 : i32
    return %c0_i32, %c0_i32_0 : i32, i32
  }
  func.func @transform_4(%arg0: i32) -> (i32, i32) {
    %c0_i32 = arith.constant 0 : i32
    %c0_i32_0 = arith.constant 0 : i32
    %c0_i32_1 = arith.constant 0 : i32
    return %c0_i32, %c0_i32_0 : i32, i32
  }
  func.func @transform_5(%arg0: i32) -> (i32, i32, i32) {
    %c0_i32 = arith.constant 0 : i32
    %c0_i32_0 = arith.constant 0 : i32
    %c0_i32_1 = arith.constant 0 : i32
    return %arg0, %c0_i32, %c0_i32_0 : i32, i32, i32
  }
}

</mosaic_0001>

<llo_original>
// kernel: tpu_custom_call.1
$region0: #{tpu_custom_call.1}
  #allocation0 [shape = 'u32[]', space=smem, size = 0x4, offset = 0x4, fixed_abs, tag = 'smem constant byte address 0x4 - core index']
  #allocation1 [shape = 'u32[144,128]{1,0:T(1,128)}', space=vmem, size = 0x12000, scoped, tag = 'internal scratch']
  %s0 = inlined_call_operand.vmem [shape: f32[16,2,8,8], index: 0, kind: input, shape index: {}]
  %s1 = inlined_call_operand.vmem [shape: f32[16,2,8,8], index: 1, kind: input, shape index: {}]
  %s2 = inlined_call_operand.vmem [shape: bf16[8,8], index: 2, kind: input, shape index: {}]
  %s3 = inlined_call_operand.vmem [shape: bf16[8,8], index: 3, kind: input, shape index: {}]
  %s4 = inlined_call_operand.vmem [shape: f32[1,8], index: 4, kind: input, shape index: {}]
  %s5 = inlined_call_operand.vmem [shape: f32[16,8,8], index: 5, kind: output, shape index: {}]
  %s6 = sld [smem:[#allocation0]]
  $region129: #{tpu_custom_call.1} parent=0
    _
  %s8 = ssub.s32 1, %s6
  %s9 = scalar_select 0, %s8, %s6
  $region1: #{tpu_custom_call.1} parent=0
    #allocation2 [shape = 'u8[65536]{0}', space=vmem, size = 0x10000, scoped, tag = 'input window, operand 0']
    #allocation3 [shape = 'u8[65536]{0}', space=vmem, size = 0x10000, scoped, tag = 'input window, operand 1']
    loop: start=0, step=1, limit=4
    $region2: #{tpu_custom_call.1} parent=1 // loop_pre_header
      _
    $region3: #{tpu_custom_call.1} parent=1 // loop_header
      %s11 = sphi 0, %s15
      %p12 = scmp.ge.s32.totalorder %s11, 4
      %s21 = sphi 0, %s23
      %s24 = sphi 0, %s21
      %s25 = sphi 0, %s24
      %s41 = sphi 0, %s25
      %s47 = sphi 0, %s49
      %s50 = sphi 0, %s47
      %s51 = sphi 0, %s50
      %s67 = sphi 0, %s51
      %s71 = sphi 0, %s71
      %s73 = sphi 0, %s71
      %s74 = sphi 0, %s73
      %s88 = sphi 0, %s74
      %s92 = sphi 0, %s92
      %s94 = sphi 0, %s92
      %s95 = sphi 0, %s94
      %s109 = sphi 0, %s95
      %s113 = sphi 0, %s113
      %s115 = sphi 0, %s113
      %s116 = sphi 0, %s115
      %s130 = sphi 0, %s116
      %s136 = sphi 0, %s138
      %s139 = sphi 0, %s136
      %s140 = sphi 0, %s139
      %s156 = sphi 0, %s140
    $region4: #{tpu_custom_call.1} parent=1 // loop_header_branch
      %14 = sbr.rel (%p12) target = $region8
    $region5: #{tpu_custom_call.1} parent=1 // loop_body
      %s16 = ssub.s32 %s11, 1
      %s17 = ssub.s32 %s11, 2
      %s18 = sadd.s32 %s11, 1
      %s19 = ssub.s32 %s11, %s18
      %p20 = scmp.eq.s32.totalorder %s19, 0
      %s22 = sadd.s32 %s21, 1
      %s23 = scalar_select %p20, %s21, %s22
      %p26 = pneg %p20
      %p27 = scmp.eq.s32.totalorder %s11, 1
      %p28 = por %p26, %p27
      %p29 = scmp.ne.s32.totalorder %s21, %s24
      %p30 = scmp.eq.s32.totalorder %s11, 0
      %p31 = por %p29, %p30
      %p32 = scmp.ne.s32.totalorder %s21, %s24
      %p33 = scmp.eq.s32.totalorder %s16, 1
      %p34 = por %p32, %p33
      %p35 = scmp.ne.s32.totalorder %s24, %s25
      %p36 = scmp.eq.s32.totalorder %s16, 0
      %p37 = por %p35, %p36
      %p38 = scmp.ne.s32.totalorder %s24, %s25
      %p39 = scmp.eq.s32.totalorder %s17, 1
      %p40 = por %p38, %p39
      %p42 = scmp.ne.s32.totalorder %s25, %s41
      %p43 = scmp.eq.s32.totalorder %s17, 0
      %p44 = por %p42, %p43
      %s45 = ssub.s32 %s11, %s18
      %p46 = scmp.eq.s32.totalorder %s45, 0
      %s48 = sadd.s32 %s47, 1
      %s49 = scalar_select %p46, %s47, %s48
      %p52 = pneg %p46
      %p53 = scmp.eq.s32.totalorder %s11, 1
      %p54 = por %p52, %p53
      %p55 = scmp.ne.s32.totalorder %s47, %s50
      %p56 = scmp.eq.s32.totalorder %s11, 0
      %p57 = por %p55, %p56
      %p58 = scmp.ne.s32.totalorder %s47, %s50
      %p59 = scmp.eq.s32.totalorder %s16, 1
      %p60 = por %p58, %p59
      %p61 = scmp.ne.s32.totalorder %s50, %s51
      %p62 = scmp.eq.s32.totalorder %s16, 0
      %p63 = por %p61, %p62
      %p64 = scmp.ne.s32.totalorder %s50, %s51
      %p65 = scmp.eq.s32.totalorder %s17, 1
      %p66 = por %p64, %p65
      %p68 = scmp.ne.s32.totalorder %s51, %s67
      %p69 = scmp.eq.s32.totalorder %s17, 0
      %p70 = por %p68, %p69
      %s72 = sadd.s32 %s71, 1
      %p75 = scmp.eq.s32.totalorder %s11, 1
      %p76 = scmp.ne.s32.totalorder %s71, %s73
      %p77 = scmp.eq.s32.totalorder %s11, 0
      %p78 = por %p76, %p77
      %p79 = scmp.ne.s32.totalorder %s71, %s73
      %p80 = scmp.eq.s32.totalorder %s16, 1
      %p81 = por %p79, %p80
      %p82 = scmp.ne.s32.totalorder %s73, %s74
      %p83 = scmp.eq.s32.totalorder %s16, 0
      %p84 = por %p82, %p83
      %p85 = scmp.ne.s32.totalorder %s73, %s74
      %p86 = scmp.eq.s32.totalorder %s17, 1
      %p87 = por %p85, %p86
      %p89 = scmp.ne.s32.totalorder %s74, %s88
      %p90 = scmp.eq.s32.totalorder %s17, 0
      %p91 = por %p89, %p90
      %s93 = sadd.s32 %s92, 1
      %p96 = scmp.eq.s32.totalorder %s11, 1
      %p97 = scmp.ne.s32.totalorder %s92, %s94
      %p98 = scmp.eq.s32.totalorder %s11, 0
      %p99 = por %p97, %p98
      %p100 = scmp.ne.s32.totalorder %s92, %s94
      %p101 = scmp.eq.s32.totalorder %s16, 1
      %p102 = por %p100, %p101
      %p103 = scmp.ne.s32.totalorder %s94, %s95
      %p104 = scmp.eq.s32.totalorder %s16, 0
      %p105 = por %p103, %p104
      %p106 = scmp.ne.s32.totalorder %s94, %s95
      %p107 = scmp.eq.s32.totalorder %s17, 1
      %p108 = por %p106, %p107
      %p110 = scmp.ne.s32.totalorder %s95, %s109
      %p111 = scmp.eq.s32.totalorder %s17, 0
      %p112 = por %p110, %p111
      %s114 = sadd.s32 %s113, 1
      %p117 = scmp.eq.s32.totalorder %s11, 1
      %p118 = scmp.ne.s32.totalorder %s113, %s115
      %p119 = scmp.eq.s32.totalorder %s11, 0
      %p120 = por %p118, %p119
      %p121 = scmp.ne.s32.totalorder %s113, %s115
      %p122 = scmp.eq.s32.totalorder %s16, 1
      %p123 = por %p121, %p122
      %p124 = scmp.ne.s32.totalorder %s115, %s116
      %p125 = scmp.eq.s32.totalorder %s16, 0
      %p126 = por %p124, %p125
      %p127 = scmp.ne.s32.totalorder %s115, %s116
      %p128 = scmp.eq.s32.totalorder %s17, 1
      %p129 = por %p127, %p128
      %p131 = scmp.ne.s32.totalorder %s116, %s130
      %p132 = scmp.eq.s32.totalorder %s17, 0
      %p133 = por %p131, %p132
      %s134 = ssub.s32 %s11, %s18
      %p135 = scmp.eq.s32.totalorder %s134, 0
      %s137 = sadd.s32 %s136, 1
      %s138 = scalar_select %p135, %s136, %s137
      %p141 = pneg %p135
      %p142 = scmp.eq.s32.totalorder %s11, 1
      %p143 = por %p141, %p142
      %p144 = scmp.ne.s32.totalorder %s136, %s139
      %p145 = scmp.eq.s32.totalorder %s11, 0
      %p146 = por %p144, %p145
      %p147 = scmp.ne.s32.totalorder %s136, %s139
      %p148 = scmp.eq.s32.totalorder %s16, 1
      %p149 = por %p147, %p148
      %p150 = scmp.ne.s32.totalorder %s139, %s140
      %p151 = scmp.eq.s32.totalorder %s16, 0
      %p152 = por %p150, %p151
      %p153 = scmp.ne.s32.totalorder %s139, %s140
      %p154 = scmp.eq.s32.totalorder %s17, 1
      %p155 = por %p153, %p154
      %p157 = scmp.ne.s32.totalorder %s140, %s156
      %p158 = scmp.eq.s32.totalorder %s17, 0
      %p159 = por %p157, %p158
      %p160 = scmp.le.s32.totalorder 1, %s11
      %p161 = scmp.lt.s32.totalorder %s11, 3
      %p162 = pnand %p160, %p161
      %p163 = pneg %p162
      // Predicated region
      $region9: #{tpu_custom_call.1} parent=5 // pred_check
        _
      $region10: #{tpu_custom_call.1} parent=5 // pred_check_branch
        %165 = sbr.rel (%p162) target = $region12
      $region11: #{tpu_custom_call.1} parent=5 // pred_region
        %s166 = ssub.s32 %s11, 1
        // Predicated region
        $region13: #{tpu_custom_call.1} parent=11 // pred_check
          %p167 = pneg %p84
        $region14: #{tpu_custom_call.1} parent=11 // pred_check_branch
          %169 = sbr.rel (%p167) target = $region16
        $region15: #{tpu_custom_call.1} parent=11 // pred_region
          _
        $region16: #{tpu_custom_call.1} parent=11 // pred_fallthru
          _
        // Predicated region
        $region17: #{tpu_custom_call.1} parent=11 // pred_check
          %p170 = pneg %p105
        $region18: #{tpu_custom_call.1} parent=11 // pred_check_branch
          %172 = sbr.rel (%p170) target = $region20
        $region19: #{tpu_custom_call.1} parent=11 // pred_region
          _
        $region20: #{tpu_custom_call.1} parent=11 // pred_fallthru
          _
        // Predicated region
        $region21: #{tpu_custom_call.1} parent=11 // pred_check
          %p173 = pneg %p126
        $region22: #{tpu_custom_call.1} parent=11 // pred_check_branch
          %175 = sbr.rel (%p173) target = $region24
        $region23: #{tpu_custom_call.1} parent=11 // pred_region
          _
        $region24: #{tpu_custom_call.1} parent=11 // pred_fallthru
          _
      $region12: #{tpu_custom_call.1} parent=5 // pred_fallthru
        _
      %p176 = scmp.lt.s32.totalorder %s11, 2
      // Predicated region
      $region25: #{tpu_custom_call.1} parent=5 // pred_check
        %p177 = pneg %p176
      $region26: #{tpu_custom_call.1} parent=5 // pred_check_branch
        %179 = sbr.rel (%p177) target = $region28
      $region27: #{tpu_custom_call.1} parent=5 // pred_region
        // Predicated region
        $region29: #{tpu_custom_call.1} parent=27 // pred_check
          %p180 = pneg %p31
        $region30: #{tpu_custom_call.1} parent=27 // pred_check_branch
          %182 = sbr.rel (%p180) target = $region32
        $region31: #{tpu_custom_call.1} parent=27 // pred_region
          %s183 = sand.u32 %s21, 1
          %s184 = sand.u32 %s21, 1
          %s185 = smul.addr %s184, 64
          %s186 = scalar_lea.vmem [#allocation2], %s185
          %s187 = smul.u32 8, %s11
          %s188 = smul.addr %s187, 2
          %s189 = smul.addr %s188, 8
          %s190 = scalar_lea.vmem %s0, %s189
          // Predicated region
          $region33: #{tpu_custom_call.1} parent=31 // pred_check
            _
          $region34: #{tpu_custom_call.1} parent=31 // pred_check_branch
            %192 = sbr.rel (0) target = $region36
          $region35: #{tpu_custom_call.1} parent=31 // pred_region
            // Predicated region
            $region37: #{tpu_custom_call.1} parent=35 // pred_check
              _
            $region38: #{tpu_custom_call.1} parent=35 // pred_check_branch
              %194 = sbr.rel (0) target = $region40
            $region39: #{tpu_custom_call.1} parent=35 // pred_region
              // Predicated region
              $region52: #{tpu_custom_call.1} parent=39 // pred_check
                _
              $region53: #{tpu_custom_call.1} parent=39 // pred_check_branch
                %224 = sbr.rel (0) target = $region55
              $region54: #{tpu_custom_call.1} parent=39 // pred_region
                loop: start=0, step=1, limit=1
                $region56: #{tpu_custom_call.1} parent=54 // loop_pre_header
                  _
                $region57: #{tpu_custom_call.1} parent=54 // loop_header
                  %s226 = sphi 0, %s230
                  %p227 = scmp.ge.s32.totalorder %s226, 1
                  %s231 = sphi %s190, %s190
                  %s232 = sphi %s186, %s186
                $region58: #{tpu_custom_call.1} parent=54 // loop_header_branch
                  %229 = sbr.rel (%p227) target = $region62
                $region59: #{tpu_custom_call.1} parent=54 // loop_body
                  %v233 = vld [vmem:[%s231] sm:$0xff]
                  %234 = vst [vmem:[%s232] sm:$0xff] %v233
                  %v235 = vld [vmem:[%s231 + $0x10] sm:$0xff]
                  %236 = vst [vmem:[%s232 + $0x8] sm:$0xff] %v235
                  %v237 = vld [vmem:[%s231 + $0x20] sm:$0xff]
                  %238 = vst [vmem:[%s232 + $0x10] sm:$0xff] %v237
                  %v239 = vld [vmem:[%s231 + $0x30] sm:$0xff]
                  %240 = vst [vmem:[%s232 + $0x18] sm:$0xff] %v239
                  %v241 = vld [vmem:[%s231 + $0x40] sm:$0xff]
                  %242 = vst [vmem:[%s232 + $0x20] sm:$0xff] %v241
                  %v243 = vld [vmem:[%s231 + $0x50] sm:$0xff]
                  %244 = vst [vmem:[%s232 + $0x28] sm:$0xff] %v243
                  %v245 = vld [vmem:[%s231 + $0x60] sm:$0xff]
                  %246 = vst [vmem:[%s232 + $0x30] sm:$0xff] %v245
                  %v247 = vld [vmem:[%s231 + $0x70] sm:$0xff]
                  %248 = vst [vmem:[%s232 + $0x38] sm:$0xff] %v247
                $region60: #{tpu_custom_call.1} parent=54 // loop_footer
                  %s230 = sadd.s32 1, %s226
                $region61: #{tpu_custom_call.1} parent=54 // loop_footer_branch
                  %225 = sbr.rel target = $region57
                $region62: #{tpu_custom_call.1} parent=54 // loop_exit
                  _
              $region55: #{tpu_custom_call.1} parent=39 // pred_fallthru
                _
              // Predicated region
              $region63: #{tpu_custom_call.1} parent=39 // pred_check
                _
              $region64: #{tpu_custom_call.1} parent=39 // pred_check_branch
                %250 = sbr.rel target = $region66
              $region65: #{tpu_custom_call.1} parent=39 // pred_region
                _
              $region66: #{tpu_custom_call.1} parent=39 // pred_fallthru
                _
            $region40: #{tpu_custom_call.1} parent=35 // pred_fallthru
              _
            // Predicated region
            $region41: #{tpu_custom_call.1} parent=35 // pred_check
              _
            $region42: #{tpu_custom_call.1} parent=35 // pred_check_branch
              %196 = sbr.rel target = $region44
            $region43: #{tpu_custom_call.1} parent=35 // pred_region
              %s198 = ssub.s32 256, 1
              loop: start=0, step=1, limit=1
              $region45: #{tpu_custom_call.1} parent=43 // loop_pre_header
                _
              $region46: #{tpu_custom_call.1} parent=43 // loop_header
                %s200 = sphi 0, %s204
                %p201 = scmp.ge.s32.totalorder %s200, 1
                %s205 = sphi %s190, %s190
                %s206 = sphi %s186, %s186
              $region47: #{tpu_custom_call.1} parent=43 // loop_header_branch
                %203 = sbr.rel (%p201) target = $region51
              $region48: #{tpu_custom_call.1} parent=43 // loop_body
                %v207 = vld [vmem:[%s205] sm:%s198]
                %208 = vst [vmem:[%s206] sm:%s198] %v207
                %v209 = vld [vmem:[%s205 + $0x10] sm:%s198]
                %210 = vst [vmem:[%s206 + $0x8] sm:%s198] %v209
                %v211 = vld [vmem:[%s205 + $0x20] sm:%s198]
                %212 = vst [vmem:[%s206 + $0x10] sm:%s198] %v211
                %v213 = vld [vmem:[%s205 + $0x30] sm:%s198]
                %214 = vst [vmem:[%s206 + $0x18] sm:%s198] %v213
                %v215 = vld [vmem:[%s205 + $0x40] sm:%s198]
                %216 = vst [vmem:[%s206 + $0x20] sm:%s198] %v215
                %v217 = vld [vmem:[%s205 + $0x50] sm:%s198]
                %218 = vst [vmem:[%s206 + $0x28] sm:%s198] %v217
                %v219 = vld [vmem:[%s205 + $0x60] sm:%s198]
                %220 = vst [vmem:[%s206 + $0x30] sm:%s198] %v219
                %v221 = vld [vmem:[%s205 + $0x70] sm:%s198]
                %222 = vst [vmem:[%s206 + $0x38] sm:%s198] %v221
              $region49: #{tpu_custom_call.1} parent=43 // loop_footer
                %s204 = sadd.s32 1, %s200
              $region50: #{tpu_custom_call.1} parent=43 // loop_footer_branch
                %199 = sbr.rel target = $region46
              $region51: #{tpu_custom_call.1} parent=43 // loop_exit
                _
            $region44: #{tpu_custom_call.1} parent=35 // pred_fallthru
              _
          $region36: #{tpu_custom_call.1} parent=31 // pred_fallthru
            _
          %251 = vnop
        $region32: #{tpu_custom_call.1} parent=27 // pred_fallthru
          _
        // Predicated region
        $region67: #{tpu_custom_call.1} parent=27 // pred_check
          %p252 = pneg %p57
        $region68: #{tpu_custom_call.1} parent=27 // pred_check_branch
          %254 = sbr.rel (%p252) target = $region70
        $region69: #{tpu_custom_call.1} parent=27 // pred_region
          %s255 = sand.u32 %s47, 1
          %s256 = sand.u32 %s47, 1
          %s257 = smul.addr %s256, 64
          %s258 = scalar_lea.vmem [#allocation3], %s257
          %s259 = smul.u32 8, %s11
          %s260 = smul.addr %s259, 2
          %s261 = sadd.s32 1, %s260
          %s262 = smul.addr %s261, 8
          %s263 = scalar_lea.vmem %s1, %s262
          // Predicated region
          $region71: #{tpu_custom_call.1} parent=69 // pred_check
            _
          $region72: #{tpu_custom_call.1} parent=69 // pred_check_branch
            %265 = sbr.rel (0) target = $region74
          $region73: #{tpu_custom_call.1} parent=69 // pred_region
            // Predicated region
            $region75: #{tpu_custom_call.1} parent=73 // pred_check
              _
            $region76: #{tpu_custom_call.1} parent=73 // pred_check_branch
              %267 = sbr.rel (0) target = $region78
            $region77: #{tpu_custom_call.1} parent=73 // pred_region
              // Predicated region
              $region90: #{tpu_custom_call.1} parent=77 // pred_check
                _
              $region91: #{tpu_custom_call.1} parent=77 // pred_check_branch
                %297 = sbr.rel (0) target = $region93
              $region92: #{tpu_custom_call.1} parent=77 // pred_region
                loop: start=0, step=1, limit=1
                $region94: #{tpu_custom_call.1} parent=92 // loop_pre_header
                  _
                $region95: #{tpu_custom_call.1} parent=92 // loop_header
                  %s299 = sphi 0, %s303
                  %p300 = scmp.ge.s32.totalorder %s299, 1
                  %s304 = sphi %s263, %s263
                  %s305 = sphi %s258, %s258
                $region96: #{tpu_custom_call.1} parent=92 // loop_header_branch
                  %302 = sbr.rel (%p300) target = $region100
                $region97: #{tpu_custom_call.1} parent=92 // loop_body
                  %v306 = vld [vmem:[%s304] sm:$0xff]
                  %307 = vst [vmem:[%s305] sm:$0xff] %v306
                  %v308 = vld [vmem:[%s304 + $0x10] sm:$0xff]
                  %309 = vst [vmem:[%s305 + $0x8] sm:$0xff] %v308
                  %v310 = vld [vmem:[%s304 + $0x20] sm:$0xff]
                  %311 = vst [vmem:[%s305 + $0x10] sm:$0xff] %v310
                  %v312 = vld [vmem:[%s304 + $0x30] sm:$0xff]
                  %313 = vst [vmem:[%s305 + $0x18] sm:$0xff] %v312
                  %v314 = vld [vmem:[%s304 + $0x40] sm:$0xff]
                  %315 = vst [vmem:[%s305 + $0x20] sm:$0xff] %v314
                  %v316 = vld [vmem:[%s304 + $0x50] sm:$0xff]
                  %317 = vst [vmem:[%s305 + $0x28] sm:$0xff] %v316
                  %v318 = vld [vmem:[%s304 + $0x60] sm:$0xff]
                  %319 = vst [vmem:[%s305 + $0x30] sm:$0xff] %v318
                  %v320 = vld [vmem:[%s304 + $0x70] sm:$0xff]
                  %321 = vst [vmem:[%s305 + $0x38] sm:$0xff] %v320
                $region98: #{tpu_custom_call.1} parent=92 // loop_footer
                  %s303 = sadd.s32 1, %s299
                $region99: #{tpu_custom_call.1} parent=92 // loop_footer_branch
                  %298 = sbr.rel target = $region95
                $region100: #{tpu_custom_call.1} parent=92 // loop_exit
                  _
              $region93: #{tpu_custom_call.1} parent=77 // pred_fallthru
                _
              // Predicated region
              $region101: #{tpu_custom_call.1} parent=77 // pred_check
                _
              $region102: #{tpu_custom_call.1} parent=77 // pred_check_branch
                %323 = sbr.rel target = $region104
              $region103: #{tpu_custom_call.1} parent=77 // pred_region
                _
              $region104: #{tpu_custom_call.1} parent=77 // pred_fallthru
                _
            $region78: #{tpu_custom_call.1} parent=73 // pred_fallthru
              _
            // Predicated region
            $region79: #{tpu_custom_call.1} parent=73 // pred_check
              _
            $region80: #{tpu_custom_call.1} parent=73 // pred_check_branch
              %269 = sbr.rel target = $region82
            $region81: #{tpu_custom_call.1} parent=73 // pred_region
              %s271 = ssub.s32 256, 1
              loop: start=0, step=1, limit=1
              $region83: #{tpu_custom_call.1} parent=81 // loop_pre_header
                _
              $region84: #{tpu_custom_call.1} parent=81 // loop_header
                %s273 = sphi 0, %s277
                %p274 = scmp.ge.s32.totalorder %s273, 1
                %s278 = sphi %s263, %s263
                %s279 = sphi %s258, %s258
              $region85: #{tpu_custom_call.1} parent=81 // loop_header_branch
                %276 = sbr.rel (%p274) target = $region89
              $region86: #{tpu_custom_call.1} parent=81 // loop_body
                %v280 = vld [vmem:[%s278] sm:%s271]
                %281 = vst [vmem:[%s279] sm:%s271] %v280
                %v282 = vld [vmem:[%s278 + $0x10] sm:%s271]
                %283 = vst [vmem:[%s279 + $0x8] sm:%s271] %v282
                %v284 = vld [vmem:[%s278 + $0x20] sm:%s271]
                %285 = vst [vmem:[%s279 + $0x10] sm:%s271] %v284
                %v286 = vld [vmem:[%s278 + $0x30] sm:%s271]
                %287 = vst [vmem:[%s279 + $0x18] sm:%s271] %v286
                %v288 = vld [vmem:[%s278 + $0x40] sm:%s271]
                %289 = vst [vmem:[%s279 + $0x20] sm:%s271] %v288
                %v290 = vld [vmem:[%s278 + $0x50] sm:%s271]
                %291 = vst [vmem:[%s279 + $0x28] sm:%s271] %v290
                %v292 = vld [vmem:[%s278 + $0x60] sm:%s271]
                %293 = vst [vmem:[%s279 + $0x30] sm:%s271] %v292
                %v294 = vld [vmem:[%s278 + $0x70] sm:%s271]
                %295 = vst [vmem:[%s279 + $0x38] sm:%s271] %v294
              $region87: #{tpu_custom_call.1} parent=81 // loop_footer
                %s277 = sadd.s32 1, %s273
              $region88: #{tpu_custom_call.1} parent=81 // loop_footer_branch
                %272 = sbr.rel target = $region84
              $region89: #{tpu_custom_call.1} parent=81 // loop_exit
                _
            $region82: #{tpu_custom_call.1} parent=73 // pred_fallthru
              _
          $region74: #{tpu_custom_call.1} parent=69 // pred_fallthru
            _
          %324 = vnop
        $region70: #{tpu_custom_call.1} parent=27 // pred_fallthru
          _
      $region28: #{tpu_custom_call.1} parent=5 // pred_fallthru
        _
      %p325 = scmp.le.s32.totalorder 1, %s11
      %p326 = scmp.lt.s32.totalorder %s11, 3
      %p327 = pnand %p325, %p326
      %p328 = pneg %p327
      // Predicated region
      $region105: #{tpu_custom_call.1} parent=5 // pred_check
        _
      $region106: #{tpu_custom_call.1} parent=5 // pred_check_branch
        %330 = sbr.rel (%p327) target = $region108
      $region107: #{tpu_custom_call.1} parent=5 // pred_region
        %s331 = ssub.s32 %s11, 1
        %s332 = sand.u32 %s24, 1
        %s333 = sand.u32 %s24, 1
        %s334 = smul.addr %s333, 64
        %s335 = scalar_lea.vmem [#allocation2], %s334
        // Predicated region
        $region109: #{tpu_custom_call.1} parent=107 // pred_check
          %p336 = pneg %p37
        $region110: #{tpu_custom_call.1} parent=107 // pred_check_branch
          %338 = sbr.rel (%p336) target = $region112
        $region111: #{tpu_custom_call.1} parent=107 // pred_region
          _
        $region112: #{tpu_custom_call.1} parent=107 // pred_fallthru
          _
        %s339 = sand.u32 %s50, 1
        %s340 = sand.u32 %s50, 1
        %s341 = smul.addr %s340, 64
        %s342 = scalar_lea.vmem [#allocation3], %s341
        // Predicated region
        $region113: #{tpu_custom_call.1} parent=107 // pred_check
          %p343 = pneg %p63
        $region114: #{tpu_custom_call.1} parent=107 // pred_check_branch
          %345 = sbr.rel (%p343) target = $region116
        $region115: #{tpu_custom_call.1} parent=107 // pred_region
          _
        $region116: #{tpu_custom_call.1} parent=107 // pred_fallthru
          _
        %s346 = sand.u32 %s24, 1
        %s347 = sand.u32 %s24, 1
        %s348 = smul.addr %s347, 64
        %s349 = scalar_lea.vmem [#allocation2], %s348
        %p350 = pneg %p37
        %p351 = pneg %p34
        %s352 = sand.u32 %s50, 1
        %s353 = sand.u32 %s50, 1
        %s354 = smul.addr %s353, 64
        %s355 = scalar_lea.vmem [#allocation3], %s354
        %p356 = pneg %p63
        %p357 = pneg %p60
        %p358 = pneg %p84
        %p359 = pneg %p81
        %p360 = pneg %p105
        %p361 = pneg %p102
        %p362 = pneg %p126
        %p363 = pneg %p123
        %p364 = pneg %p152
        %p365 = pneg %p149
        %s366 = smul.u32 8, %s16
        %p367 = scmp.lt.s32.totalorder %s366, 15
        %s368 = scalar_select %p367, %s366, 15
        %s369 = smul.addr %s368, 8
        %s370 = scalar_lea.vmem %s5, %s369
        %s371 = smul.u32 8, %s16
        %s372 = smul.u32 8, %s16
        %s373 = smul.u32 8, %s16
        %p374 = scmp.lt.s32.totalorder %s373, 15
        %s375 = scalar_select %p374, %s373, 15
        %s376 = smul.addr %s375, 8
        %s377 = scalar_lea.vmem %s5, %s376
        %s378 = smul.u32 8, %s16
        %v380 = vld [vmem:[%s335] sm:$0xff]
        %v381 = vld [vmem:[%s335 + $0x8] sm:$0xff]
        %v382 = vld [vmem:[%s335 + $0x10] sm:$0xff]
        %v383 = vld [vmem:[%s335 + $0x18] sm:$0xff]
        %v384 = vld [vmem:[%s335 + $0x20] sm:$0xff]
        %v385 = vld [vmem:[%s335 + $0x28] sm:$0xff]
        %v386 = vld [vmem:[%s335 + $0x30] sm:$0xff]
        %v387 = vld [vmem:[%s335 + $0x38] sm:$0xff]
        %v388 = vld [vmem:[%s342] sm:$0xff]
        %v389 = vld [vmem:[%s342 + $0x8] sm:$0xff]
        %v390 = vld [vmem:[%s342 + $0x10] sm:$0xff]
        %v391 = vld [vmem:[%s342 + $0x18] sm:$0xff]
        %v392 = vld [vmem:[%s342 + $0x20] sm:$0xff]
        %v393 = vld [vmem:[%s342 + $0x28] sm:$0xff]
        %v394 = vld [vmem:[%s342 + $0x30] sm:$0xff]
        %v395 = vld [vmem:[%s342 + $0x38] sm:$0xff]
        %vm396 = vcmask 64512
        %v397 = vsel %vm396, %v380, 0.0
        %398 = vadd.xlane.f32.xlu0 %v397
        %v399 = vpop.xlane.xlu0 %398
        %v400 = vsel %vm396, %v381, 0.0
        %401 = vadd.xlane.f32.xlu0 %v400
        %v402 = vpop.xlane.xlu0 %401
        %v403 = vsel %vm396, %v382, 0.0
        %404 = vadd.xlane.f32.xlu0 %v403
        %v405 = vpop.xlane.xlu0 %404
        %v406 = vsel %vm396, %v383, 0.0
        %407 = vadd.xlane.f32.xlu0 %v406
        %v408 = vpop.xlane.xlu0 %407
        %v409 = vsel %vm396, %v384, 0.0
        %410 = vadd.xlane.f32.xlu0 %v409
        %v411 = vpop.xlane.xlu0 %410
        %v412 = vsel %vm396, %v385, 0.0
        %413 = vadd.xlane.f32.xlu0 %v412
        %v414 = vpop.xlane.xlu0 %413
        %v415 = vsel %vm396, %v386, 0.0
        %416 = vadd.xlane.f32.xlu0 %v415
        %v417 = vpop.xlane.xlu0 %416
        %v418 = vsel %vm396, %v387, 0.0
        %419 = vadd.xlane.f32.xlu0 %v418
        %v420 = vpop.xlane.xlu0 %419
        %v421 = vsel %vm396, %v388, 0.0
        %422 = vadd.xlane.f32.xlu0 %v421
        %v423 = vpop.xlane.xlu0 %422
        %v424 = vsel %vm396, %v389, 0.0
        %425 = vadd.xlane.f32.xlu0 %v424
        %v426 = vpop.xlane.xlu0 %425
        %v427 = vsel %vm396, %v390, 0.0
        %428 = vadd.xlane.f32.xlu0 %v427
        %v429 = vpop.xlane.xlu0 %428
        %v430 = vsel %vm396, %v391, 0.0
        %431 = vadd.xlane.f32.xlu0 %v430
        %v432 = vpop.xlane.xlu0 %431
        %v433 = vsel %vm396, %v392, 0.0
        %434 = vadd.xlane.f32.xlu0 %v433
        %v435 = vpop.xlane.xlu0 %434
        %v436 = vsel %vm396, %v393, 0.0
        %437 = vadd.xlane.f32.xlu0 %v436
        %v438 = vpop.xlane.xlu0 %437
        %v439 = vsel %vm396, %v394, 0.0
        %440 = vadd.xlane.f32.xlu0 %v439
        %v441 = vpop.xlane.xlu0 %440
        %v442 = vsel %vm396, %v395, 0.0
        %443 = vadd.xlane.f32.xlu0 %v442
        %v444 = vpop.xlane.xlu0 %443
        %v445 = vadd.f32 %v399, %v423
        %v446 = vadd.f32 %v402, %v426
        %v447 = vadd.f32 %v405, %v429
        %v448 = vadd.f32 %v408, %v432
        %v449 = vadd.f32 %v411, %v435
        %v450 = vadd.f32 %v414, %v438
        %v451 = vadd.f32 %v417, %v441
        %v452 = vadd.f32 %v420, %v444
        %v453 = vmul.f32 %v380, %v380
        %v454 = vmul.f32 %v381, %v381
        %v455 = vmul.f32 %v382, %v382
        %v456 = vmul.f32 %v383, %v383
        %v457 = vmul.f32 %v384, %v384
        %v458 = vmul.f32 %v385, %v385
        %v459 = vmul.f32 %v386, %v386
        %v460 = vmul.f32 %v387, %v387
        %v461 = vsel %vm396, %v453, 0.0
        %462 = vadd.xlane.f32.xlu0 %v461
        %v463 = vpop.xlane.xlu0 %462
        %v464 = vsel %vm396, %v454, 0.0
        %465 = vadd.xlane.f32.xlu0 %v464
        %v466 = vpop.xlane.xlu0 %465
        %v467 = vsel %vm396, %v455, 0.0
        %468 = vadd.xlane.f32.xlu0 %v467
        %v469 = vpop.xlane.xlu0 %468
        %v470 = vsel %vm396, %v456, 0.0
        %471 = vadd.xlane.f32.xlu0 %v470
        %v472 = vpop.xlane.xlu0 %471
        %v473 = vsel %vm396, %v457, 0.0
        %474 = vadd.xlane.f32.xlu0 %v473
        %v475 = vpop.xlane.xlu0 %474
        %v476 = vsel %vm396, %v458, 0.0
        %477 = vadd.xlane.f32.xlu0 %v476
        %v478 = vpop.xlane.xlu0 %477
        %v479 = vsel %vm396, %v459, 0.0
        %480 = vadd.xlane.f32.xlu0 %v479
        %v481 = vpop.xlane.xlu0 %480
        %v482 = vsel %vm396, %v460, 0.0
        %483 = vadd.xlane.f32.xlu0 %v482
        %v484 = vpop.xlane.xlu0 %483
        %v485 = vmul.f32 %v388, %v388
        %v486 = vmul.f32 %v389, %v389
        %v487 = vmul.f32 %v390, %v390
        %v488 = vmul.f32 %v391, %v391
        %v489 = vmul.f32 %v392, %v392
        %v490 = vmul.f32 %v393, %v393
        %v491 = vmul.f32 %v394, %v394
        %v492 = vmul.f32 %v395, %v395
        %v493 = vsel %vm396, %v485, 0.0
        %494 = vadd.xlane.f32.xlu0 %v493
        %v495 = vpop.xlane.xlu0 %494
        %v496 = vsel %vm396, %v486, 0.0
        %497 = vadd.xlane.f32.xlu0 %v496
        %v498 = vpop.xlane.xlu0 %497
        %v499 = vsel %vm396, %v487, 0.0
        %500 = vadd.xlane.f32.xlu0 %v499
        %v501 = vpop.xlane.xlu0 %500
        %v502 = vsel %vm396, %v488, 0.0
        %503 = vadd.xlane.f32.xlu0 %v502
        %v504 = vpop.xlane.xlu0 %503
        %v505 = vsel %vm396, %v489, 0.0
        %506 = vadd.xlane.f32.xlu0 %v505
        %v507 = vpop.xlane.xlu0 %506
        %v508 = vsel %vm396, %v490, 0.0
        %509 = vadd.xlane.f32.xlu0 %v508
        %v510 = vpop.xlane.xlu0 %509
        %v511 = vsel %vm396, %v491, 0.0
        %512 = vadd.xlane.f32.xlu0 %v511
        %v513 = vpop.xlane.xlu0 %512
        %v514 = vsel %vm396, %v492, 0.0
        %515 = vadd.xlane.f32.xlu0 %v514
        %v516 = vpop.xlane.xlu0 %515
        %v517 = vadd.f32 %v463, %v495
        %v518 = vadd.f32 %v466, %v498
        %v519 = vadd.f32 %v469, %v501
        %v520 = vadd.f32 %v472, %v504
        %v521 = vadd.f32 %v475, %v507
        %v522 = vadd.f32 %v478, %v510
        %v523 = vadd.f32 %v481, %v513
        %v524 = vadd.f32 %v484, %v516
        %v525 = vmul.f32 %v445, 0.0625
        %v526 = vmul.f32 %v446, 0.0625
        %v527 = vmul.f32 %v447, 0.0625
        %v528 = vmul.f32 %v448, 0.0625
        %v529 = vmul.f32 %v449, 0.0625
        %v530 = vmul.f32 %v450, 0.0625
        %v531 = vmul.f32 %v451, 0.0625
        %v532 = vmul.f32 %v452, 0.0625
        %v533 = vmul.f32 %v517, 0.0625
        %v534 = vmul.f32 %v518, 0.0625
        %v535 = vmul.f32 %v519, 0.0625
        %v536 = vmul.f32 %v520, 0.0625
        %v537 = vmul.f32 %v521, 0.0625
        %v538 = vmul.f32 %v522, 0.0625
        %v539 = vmul.f32 %v523, 0.0625
        %v540 = vmul.f32 %v524, 0.0625
        %v541 = vmul.f32 %v525, %v525
        %v542 = vmul.f32 %v526, %v526
        %v543 = vmul.f32 %v527, %v527
        %v544 = vmul.f32 %v528, %v528
        %v545 = vmul.f32 %v529, %v529
        %v546 = vmul.f32 %v530, %v530
        %v547 = vmul.f32 %v531, %v531
        %v548 = vmul.f32 %v532, %v532
        %v549 = vsub.f32 %v533, %v541
        %v550 = vsub.f32 %v534, %v542
        %v551 = vsub.f32 %v535, %v543
        %v552 = vsub.f32 %v536, %v544
        %v553 = vsub.f32 %v537, %v545
        %v554 = vsub.f32 %v538, %v546
        %v555 = vsub.f32 %v539, %v547
        %v556 = vsub.f32 %v540, %v548
        %v557 = vmax.f32 %v549, 0.0
        %v558 = vmax.f32 %v550, 0.0
        %v559 = vmax.f32 %v551, 0.0
        %v560 = vmax.f32 %v552, 0.0
        %v561 = vmax.f32 %v553, 0.0
        %v562 = vmax.f32 %v554, 0.0
        %v563 = vmax.f32 %v555, 0.0
        %v564 = vmax.f32 %v556, 0.0
        %v565 = vadd.f32 %v557, 1e-05
        %v566 = vadd.f32 %v558, 1e-05
        %v567 = vadd.f32 %v559, 1e-05
        %v568 = vadd.f32 %v560, 1e-05
        %v569 = vadd.f32 %v561, 1e-05
        %v570 = vadd.f32 %v562, 1e-05
        %v571 = vadd.f32 %v563, 1e-05
        %v572 = vadd.f32 %v564, 1e-05
        %v573 = vrsqrt.pop %v565
        %v574 = vrsqrt.pop %v566
        %v575 = vrsqrt.pop %v567
        %v576 = vrsqrt.pop %v568
        %v577 = vrsqrt.pop %v569
        %v578 = vrsqrt.pop %v570
        %v579 = vrsqrt.pop %v571
        %v580 = vrsqrt.pop %v572
        %v581 = vmul.f32 %v525, %v573
        %v582 = vmul.f32 %v526, %v574
        %v583 = vmul.f32 %v527, %v575
        %v584 = vmul.f32 %v528, %v576
        %v585 = vmul.f32 %v529, %v577
        %v586 = vmul.f32 %v530, %v578
        %v587 = vmul.f32 %v531, %v579
        %v588 = vmul.f32 %v532, %v580
        %v589 = vmul.f32 %v380, %v573
        %v590 = vmul.f32 %v381, %v574
        %v591 = vmul.f32 %v382, %v575
        %v592 = vmul.f32 %v383, %v576
        %v593 = vmul.f32 %v384, %v577
        %v594 = vmul.f32 %v385, %v578
        %v595 = vmul.f32 %v386, %v579
        %v596 = vmul.f32 %v387, %v580
        %v597 = vsub.f32 %v589, %v581
        %v598 = vsub.f32 %v590, %v582
        %v599 = vsub.f32 %v591, %v583
        %v600 = vsub.f32 %v592, %v584
        %v601 = vsub.f32 %v593, %v585
        %v602 = vsub.f32 %v594, %v586
        %v603 = vsub.f32 %v595, %v587
        %v604 = vsub.f32 %v596, %v588
        %v605 = vmul.f32 %v388, %v573
        %v606 = vmul.f32 %v389, %v574
        %v607 = vmul.f32 %v390, %v575
        %v608 = vmul.f32 %v391, %v576
        %v609 = vmul.f32 %v392, %v577
        %v610 = vmul.f32 %v393, %v578
        %v611 = vmul.f32 %v394, %v579
        %v612 = vmul.f32 %v395, %v580
        %v613 = vsub.f32 %v605, %v581
        %v614 = vsub.f32 %v606, %v582
        %v615 = vsub.f32 %v607, %v583
        %v616 = vsub.f32 %v608, %v584
        %v617 = vsub.f32 %v609, %v585
        %v618 = vsub.f32 %v610, %v586
        %v619 = vsub.f32 %v611, %v587
        %v620 = vsub.f32 %v612, %v588
        %v621 = vpack.c.bf16 %v598, %v597
        %v622 = vpack.c.bf16 %v600, %v599
        %v623 = vpack.c.bf16 %v602, %v601
        %v624 = vpack.c.bf16 %v604, %v603
        %v625 = vld [vmem:[%s2] sm:$0xf]
        %v626 = vpack.c.bf16 %v614, %v613
        %v627 = vpack.c.bf16 %v616, %v615
        %v628 = vpack.c.bf16 %v618, %v617
        %v629 = vpack.c.bf16 %v620, %v619
        %v630 = vld [vmem:[%s3] sm:$0xf]
        %v632 = vsel %vm396, %v626, 0
        %v635 = vsel %vm396, %v627, 0
        %v638 = vsel %vm396, %v628, 0
        %v641 = vsel %vm396, %v629, 0
        %vm643 = vcmask 1043456
        %v645 = vsel %vm643, %v630, 0
        %647 = vmatprep.subr.bf16.mxu0 0
        %648 = vmatpush1.bf16.msra.mxu0 0
        %649 = vmatprep.subr.bf16.mxu0 0
        %650 = vmatpush1.bf16.msra.mxu0 0
        %651 = vmatprep.subr.bf16.mxu0 0
        %652 = vmatpush1.bf16.msra.mxu0 0
        %653 = vmatprep.subr.bf16.mxu0 0
        %654 = vmatpush1.bf16.msra.mxu0 0
        %655 = vmatprep.subr.bf16.mxu0 0
        %656 = vmatpush1.bf16.msra.mxu0 0
        %657 = vmatprep.subr.bf16.mxu0 0
        %658 = vmatpush1.bf16.msra.mxu0 0
        %659 = vmatprep.subr.bf16.mxu0 0
        %660 = vmatpush1.bf16.msra.mxu0 0
        %661 = vmatprep.subr.bf16.mxu0 0
        %662 = vmatpush1.bf16.msra.mxu0 %v645
        %663 = vmatprep.subr.bf16.mxu0 0
        %664 = vmatpush2.bf16.msra.mxu0 0
        %665 = vmatprep.subr.bf16.mxu0 0
        %666 = vmatpush2.bf16.msra.mxu0 0
        %667 = vmatprep.subr.bf16.mxu0 0
        %668 = vmatpush2.bf16.msra.mxu0 0
        %669 = vmatprep.subr.bf16.mxu0 0
        %670 = vmatpush2.bf16.msra.mxu0 0
        %671 = vmatprep.subr.bf16.mxu0 0
        %672 = vmatpush2.bf16.msra.mxu0 0
        %673 = vmatprep.subr.bf16.mxu0 0
        %674 = vmatpush2.bf16.msra.mxu0 0
        %675 = vmatprep.subr.bf16.mxu0 0
        %676 = vmatpush2.bf16.msra.mxu0 0
        %677 = vmatprep.subr.bf16.mxu0 0
        %678 = vmatpush2.bf16.msra.mxu0 0
        %679 = vmatprep.mubr.bf16.mxu0 0
        %680 = vmatmul.mubr.bf16.gmra.mxu0 %v632
        %v681 = vpop.f32.mrf.mxu0
        %v682 = vadd.f32 0.0, %v681
        %v683 = vpop.f32.mrf.mxu0
        %v684 = vpop.f32.mrf.mxu0
        %v685 = vadd.f32 0.0, %v684
        %v686 = vpop.f32.mrf.mxu0
        %687 = vmatprep.mubr.bf16.mxu0 0
        %688 = vmatmul.mubr.bf16.gmra.mxu0 %v635
        %v689 = vpop.f32.mrf.mxu0
        %v690 = vadd.f32 0.0, %v689
        %v691 = vpop.f32.mrf.mxu0
        %v692 = vpop.f32.mrf.mxu0
        %v693 = vadd.f32 0.0, %v692
        %v694 = vpop.f32.mrf.mxu0
        %695 = vmatprep.mubr.bf16.mxu0 0
        %696 = vmatmul.mubr.bf16.gmra.mxu0 %v638
        %v697 = vpop.f32.mrf.mxu0
        %v698 = vadd.f32 0.0, %v697
        %v699 = vpop.f32.mrf.mxu0
        %v700 = vpop.f32.mrf.mxu0
        %v701 = vadd.f32 0.0, %v700
        %v702 = vpop.f32.mrf.mxu0
        %703 = vmatprep.mubr.bf16.mxu0 0
        %704 = vmatmul.mubr.bf16.gmra.mxu0 %v641
        %v705 = vpop.f32.mrf.mxu0
        %v706 = vadd.f32 0.0, %v705
        %v707 = vpop.f32.mrf.mxu0
        %v708 = vpop.f32.mrf.mxu0
        %v709 = vadd.f32 0.0, %v708
        %v710 = vpop.f32.mrf.mxu0
        %711 = vdwg.mxu0
        %v713 = vsel %vm396, %v621, 0
        %v716 = vsel %vm396, %v622, 0
        %v719 = vsel %vm396, %v623, 0
        %v722 = vsel %vm396, %v624, 0
        %v725 = vsel %vm643, %v625, 0
        %727 = vmatprep.subr.bf16.mxu0 0
        %728 = vmatpush1.bf16.msra.mxu0 0
        %729 = vmatprep.subr.bf16.mxu0 0
        %730 = vmatpush1.bf16.msra.mxu0 0
        %731 = vmatprep.subr.bf16.mxu0 0
        %732 = vmatpush1.bf16.msra.mxu0 0
        %733 = vmatprep.subr.bf16.mxu0 0
        %734 = vmatpush1.bf16.msra.mxu0 0
        %735 = vmatprep.subr.bf16.mxu0 0
        %736 = vmatpush1.bf16.msra.mxu0 0
        %737 = vmatprep.subr.bf16.mxu0 0
        %738 = vmatpush1.bf16.msra.mxu0 0
        %739 = vmatprep.subr.bf16.mxu0 0
        %740 = vmatpush1.bf16.msra.mxu0 0
        %741 = vmatprep.subr.bf16.mxu0 0
        %742 = vmatpush1.bf16.msra.mxu0 %v725
        %743 = vmatprep.subr.bf16.mxu0 0
        %744 = vmatpush2.bf16.msra.mxu0 0
        %745 = vmatprep.subr.bf16.mxu0 0
        %746 = vmatpush2.bf16.msra.mxu0 0
        %747 = vmatprep.subr.bf16.mxu0 0
        %748 = vmatpush2.bf16.msra.mxu0 0
        %749 = vmatprep.subr.bf16.mxu0 0
        %750 = vmatpush2.bf16.msra.mxu0 0
        %751 = vmatprep.subr.bf16.mxu0 0
        %752 = vmatpush2.bf16.msra.mxu0 0
        %753 = vmatprep.subr.bf16.mxu0 0
        %754 = vmatpush2.bf16.msra.mxu0 0
        %755 = vmatprep.subr.bf16.mxu0 0
        %756 = vmatpush2.bf16.msra.mxu0 0
        %757 = vmatprep.subr.bf16.mxu0 0
        %758 = vmatpush2.bf16.msra.mxu0 0
        %759 = vmatprep.mubr.bf16.mxu0 0
        %760 = vmatmul.mubr.bf16.gmra.mxu0 %v713
        %v761 = vpop.f32.mrf.mxu0
        %v762 = vadd.f32 %v682, %v761
        %v763 = vpop.f32.mrf.mxu0
        %v764 = vpop.f32.mrf.mxu0
        %v765 = vadd.f32 %v685, %v764
        %v766 = vpop.f32.mrf.mxu0
        %767 = vmatprep.mubr.bf16.mxu0 0
        %768 = vmatmul.mubr.bf16.gmra.mxu0 %v716
        %v769 = vpop.f32.mrf.mxu0
        %v770 = vadd.f32 %v690, %v769
        %v771 = vpop.f32.mrf.mxu0
        %v772 = vpop.f32.mrf.mxu0
        %v773 = vadd.f32 %v693, %v772
        %v774 = vpop.f32.mrf.mxu0
        %775 = vmatprep.mubr.bf16.mxu0 0
        %776 = vmatmul.mubr.bf16.gmra.mxu0 %v719
        %v777 = vpop.f32.mrf.mxu0
        %v778 = vadd.f32 %v698, %v777
        %v779 = vpop.f32.mrf.mxu0
        %v780 = vpop.f32.mrf.mxu0
        %v781 = vadd.f32 %v701, %v780
        %v782 = vpop.f32.mrf.mxu0
        %783 = vmatprep.mubr.bf16.mxu0 0
        %784 = vmatmul.mubr.bf16.gmra.mxu0 %v722
        %v785 = vpop.f32.mrf.mxu0
        %v786 = vadd.f32 %v706, %v785
        %v787 = vpop.f32.mrf.mxu0
        %v788 = vpop.f32.mrf.mxu0
        %v789 = vadd.f32 %v709, %v788
        %v790 = vpop.f32.mrf.mxu0
        %791 = vdwg.mxu0
        %v792 = vld [vmem:[%s4] sm:$0x1]
        %v794 = vlaneseq
        %v795 = vshrl.u32 %v794, 7
        %v796 = vsub.s32 0, %v795
        %v797 = vrot.slane %v792, %v796
        %v799 = vadd.f32 %v762, %v797
        %v800 = vadd.f32 %v765, %v797
        %v801 = vadd.f32 %v770, %v797
        %v802 = vadd.f32 %v773, %v797
        %v803 = vadd.f32 %v778, %v797
        %v804 = vadd.f32 %v781, %v797
        %v805 = vadd.f32 %v786, %v797
        %v806 = vadd.f32 %v789, %v797
        %807 = vst.msk [vmem:[%s377] sm:$0xff] %vm396, %v799
        %808 = vst.msk [vmem:[%s377 + $0x8] sm:$0xff] %vm396, %v800
        %809 = vst.msk [vmem:[%s377 + $0x10] sm:$0xff] %vm396, %v801
        %810 = vst.msk [vmem:[%s377 + $0x18] sm:$0xff] %vm396, %v802
        %811 = vst.msk [vmem:[%s377 + $0x20] sm:$0xff] %vm396, %v803
        %812 = vst.msk [vmem:[%s377 + $0x28] sm:$0xff] %vm396, %v804
        %813 = vst.msk [vmem:[%s377 + $0x30] sm:$0xff] %vm396, %v805
        %814 = vst.msk [vmem:[%s377 + $0x38] sm:$0xff] %vm396, %v806
        %s815 = smul.u32 8, %s16
        %p816 = scmp.lt.s32.totalorder %s815, 15
        %s817 = scalar_select %p816, %s815, 15
        %s818 = smul.addr %s817, 8
        %s819 = scalar_lea.vmem %s5, %s818
        // Predicated region
        $region117: #{tpu_custom_call.1} parent=107 // pred_check
          %p820 = pneg %p149
        $region118: #{tpu_custom_call.1} parent=107 // pred_check_branch
          %822 = sbr.rel (%p820) target = $region120
        $region119: #{tpu_custom_call.1} parent=107 // pred_region
          %s823 = smul.u32 8, %s16
        $region120: #{tpu_custom_call.1} parent=107 // pred_fallthru
          _
      $region108: #{tpu_custom_call.1} parent=5 // pred_fallthru
        _
      %p824 = scmp.le.s32.totalorder 2, %s11
      // Predicated region
      $region121: #{tpu_custom_call.1} parent=5 // pred_check
        %p825 = pneg %p824
      $region122: #{tpu_custom_call.1} parent=5 // pred_check_branch
        %827 = sbr.rel (%p825) target = $region124
      $region123: #{tpu_custom_call.1} parent=5 // pred_region
        %s828 = ssub.s32 %s11, 2
        // Predicated region
        $region125: #{tpu_custom_call.1} parent=123 // pred_check
          %p829 = pneg %p155
        $region126: #{tpu_custom_call.1} parent=123 // pred_check_branch
          %831 = sbr.rel (%p829) target = $region128
        $region127: #{tpu_custom_call.1} parent=123 // pred_region
          %s832 = smul.u32 8, %s17
          %p833 = scmp.lt.s32.totalorder %s832, 15
          %s834 = scalar_select %p833, %s832, 15
          %s835 = smul.addr %s834, 8
          %s836 = scalar_lea.vmem %s5, %s835
        $region128: #{tpu_custom_call.1} parent=123 // pred_fallthru
          _
      $region124: #{tpu_custom_call.1} parent=5 // pred_fallthru
        _
    $region6: #{tpu_custom_call.1} parent=1 // loop_footer
      %s15 = sadd.s32 1, %s11
    $region7: #{tpu_custom_call.1} parent=1 // loop_footer_branch
      %10 = sbr.rel target = $region3
    $region8: #{tpu_custom_call.1} parent=1 // loop_exit
      _

</llo_original>
